<compile_context>
chip_gen: v6e
topology: v6e:2x2x1
jax: 0.10.0
libtpu: 0.0.40
codegen_flags: <defaults>
</compile_context>

<pallas_src>
import jax
import jax.numpy as jnp
from jax.experimental import pallas as pl
from jax.experimental.pallas import tpu as pltpu


def basic_block_2d(x, conv1_w, bn1, conv2_w, bn2, *, eps=1e-5, images_per_step=None):
    """x: (B, Cin, H, W) NCHW.  conv*_w: (P, Cin, 3, 3) / (P, P, 3, 3).
    bn1, bn2: tuples (gamma, beta, running_mean, running_var), each (P,).
    Returns (B, P, H, W). stride=1 / downsample=None path."""
    B, Cin, H, W = x.shape
    P = conv1_w.shape[0]
    assert conv1_w.shape == (P, Cin, 3, 3) and conv2_w.shape == (P, P, 3, 3)
    assert Cin == P, "identity skip requires inplanes == planes (stride=1, no downsample)"

    Wp = W + 2                            # padded row width (kept through the whole kernel)
    Np_raw = (H + 2) * Wp                 # zero-padded input plane, flattened
    N = H * Wp                            # flattened output length (2 junk cols per row)
    Npad = pl.cdiv(Np_raw, 128) * 128     # lane-dense plane width (multiple of 128)
    CENTER = Wp + 1                       # flat offset of the 3x3 centre tap

    # images per grid step: fill the 8-row f32 sublane tile by default
    if images_per_step is None:
        GB = min(B, max(1, 8 // Cin))
        while B % GB:
            GB -= 1
    else:
        GB = images_per_step
    assert B % GB == 0
    steps = B // GB

    # ---- fold BatchNorm (eval mode) into conv weights / bias --------------------
    def fold(w, bn_params):
        g, bta, m, v = bn_params
        s = g / jnp.sqrt(v + eps)                                  # (P,)
        return (w * s[:, None, None, None]).astype(jnp.float32), (bta - m * s).astype(jnp.float32)

    # (P, C, 3, 3) -> (GB*P, 9*GB*C): one matmul per conv over (tap, image, channel),
    # block-diagonal over the GB images fused into a grid step.
    def stack(wf, cin):
        wk = jnp.transpose(wf, (2, 3, 0, 1)).reshape(9, P, cin)    # (tap, P, cin)
        eye = jnp.eye(GB, dtype=jnp.float32)
        big = jnp.einsum('tpc,gh->gpthc', wk, eye)                 # (GB, P, 9, GB, cin)
        return big.reshape(GB * P, 9 * GB * cin)

    w1f, b1v = fold(conv1_w, bn1)
    w2f, b2v = fold(conv2_w, bn2)
    w1 = stack(w1f, Cin)                                           # (GB*P, 9*GB*Cin)
    w2 = stack(w2f, P)                                             # (GB*P, 9*GB*P)
    b1 = jnp.tile(b1v, GB).reshape(GB * P, 1)
    b2 = jnp.tile(b2v, GB).reshape(GB * P, 1)

    # ---- pad spatially (needed by the conv anyway), flatten, lane-pad to 128 ----
    xpad = jnp.pad(x.astype(jnp.float32), ((0, 0), (0, 0), (1, 1), (1, 1)))  # (B, Cin, H+2, Wp)
    xflat = xpad.reshape(B, Cin, Np_raw)
    xflat = jnp.pad(xflat, ((0, 0), (0, 0), (0, Npad - Np_raw))).reshape(B * Cin, Npad)

    # 0/1 mask over the flattened plane: zero the 2 junk cols per row and the lane tail
    lane = jnp.arange(Npad, dtype=jnp.int32)
    colmask = ((lane < N) & (lane % Wp < W)).astype(jnp.float32).reshape(1, Npad)

    tap_offs = [dh * Wp + dw for dh in range(3) for dw in range(3)]

    # ---- kernel ------------------------------------------------------------------
    def kernel(x_ref, w1_ref, b1_ref, w2_ref, b2_ref, mask_ref, o_ref):
        xb = x_ref[...]                                            # (GB*Cin, Npad)

        def shifted(plane, base):
            # tap (dh,dw): value at output position n comes from plane[n + off - base]
            outs = []
            for off in tap_offs:
                s = (base - off) % Npad
                outs.append(plane if s == 0 else pltpu.roll(plane, s, axis=1))
            return outs

        # conv1 + bn1 (folded) + relu: one MXU matmul over (tap, image, in-channel)
        x_taps = shifted(xb, 0)
        a1 = jnp.dot(w1_ref[...], jnp.concatenate(x_taps, axis=0),
                     preferred_element_type=jnp.float32) + b1_ref[...]
        # junk cols / lane tail -> 0; they become conv2's zero padding
        y1 = jnp.maximum(a1, 0.0) * mask_ref[...]                  # (GB*P, Npad)

        # conv2 + bn2 (folded): taps come straight from the register-resident y1
        y_taps = shifted(y1, CENTER)
        a2 = jnp.dot(w2_ref[...], jnp.concatenate(y_taps, axis=0),
                     preferred_element_type=jnp.float32) + b2_ref[...]

        # identity skip = centre tap of x (same rows since inplanes == planes)
        o_ref[...] = jnp.maximum(a2 + x_taps[4], 0.0)

    out = pl.pallas_call(
        kernel,
        out_shape=jax.ShapeDtypeStruct((B * P, Npad), jnp.float32),
        grid_spec=pltpu.PrefetchScalarGridSpec(
            num_scalar_prefetch=0,
            grid=(steps,),
            in_specs=[
                pl.BlockSpec((GB * Cin, Npad), lambda i: (i, 0)),          # fused (image, chan) x plane
                pl.BlockSpec((GB * P, 9 * GB * Cin), lambda i: (0, 0)),    # stacked conv1 weights
                pl.BlockSpec((GB * P, 1), lambda i: (0, 0)),               # folded bn1 bias
                pl.BlockSpec((GB * P, 9 * GB * P), lambda i: (0, 0)),      # stacked conv2 weights
                pl.BlockSpec((GB * P, 1), lambda i: (0, 0)),               # folded bn2 bias
                pl.BlockSpec((1, Npad), lambda i: (0, 0)),                 # valid-position mask
            ],
            out_specs=pl.BlockSpec((GB * P, Npad), lambda i: (i, 0)),
        ),
        compiler_params=pltpu.CompilerParams(
            dimension_semantics=("parallel",)),
    )(xflat, w1, b1, w2, b2, colmask)

    # (B*P, Npad) -> (B, P, H, W): drop the lane tail and the 2 junk cols per row
    return out.reshape(B, P, Npad)[:, :, :N].reshape(B, P, H, Wp)[:, :, :, :W]


def _reference(x, conv1_w, bn1, conv2_w, bn2, *, eps=1e-5):
    """Pure-JAX mirror of the PyTorch forward (eval-mode BN, stride=1, no downsample)."""
    def conv(z, w):
        return jax.lax.conv_general_dilated(
            z, w, window_strides=(1, 1), padding=((1, 1), (1, 1)),
            dimension_numbers=("NCHW", "OIHW", "NCHW"),
            precision=jax.lax.Precision.HIGHEST)

    def bn(z, params):
        g, b, m, v = params
        s = g / jnp.sqrt(v + eps)
        return z * s[None, :, None, None] + (b - m * s)[None, :, None, None]

    out = jax.nn.relu(bn(conv(x, conv1_w), bn1))
    out = bn(conv(out, conv2_w), bn2)
    return jax.nn.relu(out + x)


if __name__ == "__main__":
    key = jax.random.PRNGKey(0)
    ks = jax.random.split(key, 12)

    # Small shapes consistent with the module: NCHW, inplanes == planes, stride=1.
    B, C, H, W = 2, 4, 16, 16
    x = jax.random.normal(ks[0], (B, C, H, W), dtype=jnp.float32)

    conv1_w = jax.random.normal(ks[1], (C, C, 3, 3), dtype=jnp.float32) * 0.2
    conv2_w = jax.random.normal(ks[2], (C, C, 3, 3), dtype=jnp.float32) * 0.2

    bn1 = (jnp.abs(jax.random.normal(ks[3], (C,), jnp.float32)) + 0.5,   # gamma
           jax.random.normal(ks[4], (C,), jnp.float32) * 0.1,            # beta
           jax.random.normal(ks[5], (C,), jnp.float32) * 0.1,            # running_mean
           jnp.abs(jax.random.normal(ks[6], (C,), jnp.float32)) + 0.5)   # running_var
    bn2 = (jnp.abs(jax.random.normal(ks[7], (C,), jnp.float32)) + 0.5,
           jax.random.normal(ks[8], (C,), jnp.float32) * 0.1,
           jax.random.normal(ks[9], (C,), jnp.float32) * 0.1,
           jnp.abs(jax.random.normal(ks[10], (C,), jnp.float32)) + 0.5)

    out = basic_block_2d(x, conv1_w, bn1, conv2_w, bn2)
    out = jax.block_until_ready(out)

    ref = _reference(x, conv1_w, bn1, conv2_w, bn2)
    assert out.shape == (B, C, H, W), out.shape
    err = float(jnp.max(jnp.abs(out - ref)))
    assert jnp.allclose(out, ref, atol=2e-3, rtol=2e-3), err

    print("KERNEL_OK")
</pallas_src>

<mosaic_0001>
module attributes {stable_mosaic.version = 11 : i64} {
  func.func @kernel(%arg0: i32, %arg1: memref<8x384xf32, #tpu.memory_space<vmem>>, %arg2: memref<8x72xf32, #tpu.memory_space<vmem>>, %arg3: memref<8x1xf32, #tpu.memory_space<vmem>>, %arg4: memref<8x72xf32, #tpu.memory_space<vmem>>, %arg5: memref<8x1xf32, #tpu.memory_space<vmem>>, %arg6: memref<1x384xf32, #tpu.memory_space<vmem>>, %arg7: memref<8x384xf32, #tpu.memory_space<vmem>>) attributes {dimension_semantics = [#tpu.dimension_semantics<parallel>], iteration_bounds = array<i64: 1>, scalar_prefetch = 0 : i64, scratch_operands = 0 : i64, tpu.core_type = #tpu.core_type<tc>, window_params = [{transform_indices = @transform_0, window_bounds = array<i64: 8, 384>}, {pipeline_mode = #tpu.pipeline_mode<synchronous>, transform_indices = @transform_1, window_bounds = array<i64: 8, 72>}, {pipeline_mode = #tpu.pipeline_mode<synchronous>, transform_indices = @transform_2, window_bounds = array<i64: 8, 1>}, {pipeline_mode = #tpu.pipeline_mode<synchronous>, transform_indices = @transform_3, window_bounds = array<i64: 8, 72>}, {pipeline_mode = #tpu.pipeline_mode<synchronous>, transform_indices = @transform_4, window_bounds = array<i64: 8, 1>}, {pipeline_mode = #tpu.pipeline_mode<synchronous>, transform_indices = @transform_5, window_bounds = array<i64: 1, 384>}, {transform_indices = @transform_6, window_bounds = array<i64: 8, 384>}]} {
    %c0 = arith.constant 0 : index
    %c0_0 = arith.constant 0 : index
    %0 = vector.load %arg1[%c0, %c0_0] : memref<8x384xf32, #tpu.memory_space<vmem>>, vector<8x384xf32>
    %c383_i32 = arith.constant 383 : i32
    %1 = tpu.dynamic_rotate %0 by %c383_i32 dim 1 : vector<8x384xf32>, i32 -> vector<8x384xf32>
    %c382_i32 = arith.constant 382 : i32
    %2 = tpu.dynamic_rotate %0 by %c382_i32 dim 1 : vector<8x384xf32>, i32 -> vector<8x384xf32>
    %c366_i32 = arith.constant 366 : i32
    %3 = tpu.dynamic_rotate %0 by %c366_i32 dim 1 : vector<8x384xf32>, i32 -> vector<8x384xf32>
    %c365_i32 = arith.constant 365 : i32
    %4 = tpu.dynamic_rotate %0 by %c365_i32 dim 1 : vector<8x384xf32>, i32 -> vector<8x384xf32>
    %c364_i32 = arith.constant 364 : i32
    %5 = tpu.dynamic_rotate %0 by %c364_i32 dim 1 : vector<8x384xf32>, i32 -> vector<8x384xf32>
    %c348_i32 = arith.constant 348 : i32
    %6 = tpu.dynamic_rotate %0 by %c348_i32 dim 1 : vector<8x384xf32>, i32 -> vector<8x384xf32>
    %c347_i32 = arith.constant 347 : i32
    %7 = tpu.dynamic_rotate %0 by %c347_i32 dim 1 : vector<8x384xf32>, i32 -> vector<8x384xf32>
    %c346_i32 = arith.constant 346 : i32
    %8 = tpu.dynamic_rotate %0 by %c346_i32 dim 1 : vector<8x384xf32>, i32 -> vector<8x384xf32>
    %c0_1 = arith.constant 0 : index
    %c0_2 = arith.constant 0 : index
    %9 = vector.load %arg2[%c0_1, %c0_2] : memref<8x72xf32, #tpu.memory_space<vmem>>, vector<8x72xf32>
    %10 = tpu.concatenate %0, %1, %2, %3, %4, %5, %6, %7, %8 in 0 : vector<8x384xf32>, vector<8x384xf32>, vector<8x384xf32>, vector<8x384xf32>, vector<8x384xf32>, vector<8x384xf32>, vector<8x384xf32>, vector<8x384xf32>, vector<8x384xf32> -> vector<72x384xf32>
    %cst = arith.constant dense<0.000000e+00> : vector<8x384xf32>
    %11 = tpu.matmul %9, %10, %cst {dimension_numbers = #tpu.dot_dimension_numbers<[1], [0], [0], [1], [0, 0, 1, 1], [], []>} : vector<8x72xf32>, vector<72x384xf32>, vector<8x384xf32> -> vector<8x384xf32>
    %c0_3 = arith.constant 0 : index
    %c0_4 = arith.constant 0 : index
    %12 = vector.load %arg3[%c0_3, %c0_4] : memref<8x1xf32, #tpu.memory_space<vmem>>, vector<8x1xf32>
    %13 = vector.broadcast %12 : vector<8x1xf32> to vector<8x384xf32>
    %14 = arith.addf %11, %13 : vector<8x384xf32>
    %cst_5 = arith.constant 0.000000e+00 : f32
    %15 = vector.broadcast %cst_5 : f32 to vector<8x384xf32>
    %16 = arith.maximumf %14, %15 : vector<8x384xf32>
    %c0_6 = arith.constant 0 : index
    %c0_7 = arith.constant 0 : index
    %17 = vector.load %arg6[%c0_6, %c0_7] : memref<1x384xf32, #tpu.memory_space<vmem>>, vector<1x384xf32>
    %18 = vector.broadcast %17 : vector<1x384xf32> to vector<8x384xf32>
    %19 = arith.mulf %16, %18 : vector<8x384xf32>
    %c19_i32 = arith.constant 19 : i32
    %20 = tpu.dynamic_rotate %19 by %c19_i32 dim 1 : vector<8x384xf32>, i32 -> vector<8x384xf32>
    %c18_i32 = arith.constant 18 : i32
    %21 = tpu.dynamic_rotate %19 by %c18_i32 dim 1 : vector<8x384xf32>, i32 -> vector<8x384xf32>
    %c17_i32 = arith.constant 17 : i32
    %22 = tpu.dynamic_rotate %19 by %c17_i32 dim 1 : vector<8x384xf32>, i32 -> vector<8x384xf32>
    %c1_i32 = arith.constant 1 : i32
    %23 = tpu.dynamic_rotate %19 by %c1_i32 dim 1 : vector<8x384xf32>, i32 -> vector<8x384xf32>
    %c383_i32_8 = arith.constant 383 : i32
    %24 = tpu.dynamic_rotate %19 by %c383_i32_8 dim 1 : vector<8x384xf32>, i32 -> vector<8x384xf32>
    %c367_i32 = arith.constant 367 : i32
    %25 = tpu.dynamic_rotate %19 by %c367_i32 dim 1 : vector<8x384xf32>, i32 -> vector<8x384xf32>
    %c366_i32_9 = arith.constant 366 : i32
    %26 = tpu.dynamic_rotate %19 by %c366_i32_9 dim 1 : vector<8x384xf32>, i32 -> vector<8x384xf32>
    %c365_i32_10 = arith.constant 365 : i32
    %27 = tpu.dynamic_rotate %19 by %c365_i32_10 dim 1 : vector<8x384xf32>, i32 -> vector<8x384xf32>
    %c0_11 = arith.constant 0 : index
    %c0_12 = arith.constant 0 : index
    %28 = vector.load %arg4[%c0_11, %c0_12] : memref<8x72xf32, #tpu.memory_space<vmem>>, vector<8x72xf32>
    %29 = tpu.concatenate %20, %21, %22, %23, %19, %24, %25, %26, %27 in 0 : vector<8x384xf32>, vector<8x384xf32>, vector<8x384xf32>, vector<8x384xf32>, vector<8x384xf32>, vector<8x384xf32>, vector<8x384xf32>, vector<8x384xf32>, vector<8x384xf32> -> vector<72x384xf32>
    %cst_13 = arith.constant dense<0.000000e+00> : vector<8x384xf32>
    %30 = tpu.matmul %28, %29, %cst_13 {dimension_numbers = #tpu.dot_dimension_numbers<[1], [0], [0], [1], [0, 0, 1, 1], [], []>} : vector<8x72xf32>, vector<72x384xf32>, vector<8x384xf32> -> vector<8x384xf32>
    %c0_14 = arith.constant 0 : index
    %c0_15 = arith.constant 0 : index
    %31 = vector.load %arg5[%c0_14, %c0_15] : memref<8x1xf32, #tpu.memory_space<vmem>>, vector<8x1xf32>
    %32 = vector.broadcast %31 : vector<8x1xf32> to vector<8x384xf32>
    %33 = arith.addf %30, %32 : vector<8x384xf32>
    %34 = arith.addf %33, %4 : vector<8x384xf32>
    %cst_16 = arith.constant 0.000000e+00 : f32
    %35 = vector.broadcast %cst_16 : f32 to vector<8x384xf32>
    %36 = arith.maximumf %34, %35 : vector<8x384xf32>
    %c0_17 = arith.constant 0 : index
    %c0_18 = arith.constant 0 : index
    %37 = vector.load %arg7[%c0_17, %c0_18] : memref<8x384xf32, #tpu.memory_space<vmem>>, vector<8x384xf32>
    tpu.vector_store %arg7[%c0_17, %c0_18], %36 {strides = array<i32>} : memref<8x384xf32, #tpu.memory_space<vmem>>, vector<8x384xf32>,
    return
  }
  func.func @transform_0(%arg0: i32) -> (i32, i32) {
    %c0_i32 = arith.constant 0 : i32
    %c0_i32_0 = arith.constant 0 : i32
    return %arg0, %c0_i32 : i32, i32
  }
  func.func @transform_1(%arg0: i32) -> (i32, i32) {
    %c0_i32 = arith.constant 0 : i32
    %c0_i32_0 = arith.constant 0 : i32
    %c0_i32_1 = arith.constant 0 : i32
    return %c0_i32, %c0_i32_0 : i32, i32
  }
  func.func @transform_2(%arg0: i32) -> (i32, i32) {
    %c0_i32 = arith.constant 0 : i32
    %c0_i32_0 = arith.constant 0 : i32
    %c0_i32_1 = arith.constant 0 : i32
    return %c0_i32, %c0_i32_0 : i32, i32
  }
  func.func @transform_3(%arg0: i32) -> (i32, i32) {
    %c0_i32 = arith.constant 0 : i32
    %c0_i32_0 = arith.constant 0 : i32
    %c0_i32_1 = arith.constant 0 : i32
    return %c0_i32, %c0_i32_0 : i32, i32
  }
  func.func @transform_4(%arg0: i32) -> (i32, i32) {
    %c0_i32 = arith.constant 0 : i32
    %c0_i32_0 = arith.constant 0 : i32
    %c0_i32_1 = arith.constant 0 : i32
    return %c0_i32, %c0_i32_0 : i32, i32
  }
  func.func @transform_5(%arg0: i32) -> (i32, i32) {
    %c0_i32 = arith.constant 0 : i32
    %c0_i32_0 = arith.constant 0 : i32
    %c0_i32_1 = arith.constant 0 : i32
    return %c0_i32, %c0_i32_0 : i32, i32
  }
  func.func @transform_6(%arg0: i32) -> (i32, i32) {
    %c0_i32 = arith.constant 0 : i32
    %c0_i32_0 = arith.constant 0 : i32
    return %arg0, %c0_i32 : i32, i32
  }
}

</mosaic_0001>

<llo_original>
// kernel: tpu_custom_call.1
$region0: #{tpu_custom_call.1}
  #allocation0 [shape = 'u32[]', space=smem, size = 0x4, offset = 0x4, fixed_abs, tag = 'smem constant byte address 0x4 - core index']
  #allocation1 [shape = 'u32[144,128]{1,0:T(1,128)}', space=vmem, size = 0x12000, scoped, tag = 'internal scratch']
  %s0 = inlined_call_operand.hbm [shape: f32[8,384], index: 0, kind: input, shape index: {}]
  %s1 = inlined_call_operand.vmem [shape: f32[8,72], index: 1, kind: input, shape index: {}]
  %s2 = inlined_call_operand.vmem [shape: f32[8,1], index: 2, kind: input, shape index: {}]
  %s3 = inlined_call_operand.vmem [shape: f32[8,72], index: 3, kind: input, shape index: {}]
  %s4 = inlined_call_operand.vmem [shape: f32[8,1], index: 4, kind: input, shape index: {}]
  %s5 = inlined_call_operand.vmem [shape: f32[1,384], index: 5, kind: input, shape index: {}]
  %s6 = inlined_call_operand.hbm [shape: f32[8,384], index: 6, kind: output, shape index: {}]
  %s7 = sld [smem:[#allocation0]]
  $region38: #{tpu_custom_call.1} parent=0
    _
  %s9 = ssub.s32 1, %s7
  %s10 = scalar_select 0, %s9, %s7
  $region1: #{tpu_custom_call.1} parent=0
    #allocation2 [shape = 'u8[12288]{0}', space=vmem, size = 0x3000, scoped, tag = 'input window, operand 0, single buffered']
    #allocation3 [shape = 's32[1]{0}', space=sflag, size = 0x4, scoped, tag = 'scoped memory for tpu_custom_call.1']
    #allocation4 [shape = 's32[1]{0}', space=sflag, size = 0x4, scoped, tag = 'scoped memory for tpu_custom_call.1']
    #allocation5 [shape = 'u8[12288]{0}', space=vmem, size = 0x3000, scoped, tag = 'output window, operand 0, single buffered']
    %11 = vsyncpa [#allocation3], 0
    %12 = vsyncpa [#allocation4], 0
    // Predicated region
    $region2: #{tpu_custom_call.1} parent=1 // pred_check
      _
    $region3: #{tpu_custom_call.1} parent=1 // pred_check_branch
      %14 = sbr.rel (0) target = $region5
    $region4: #{tpu_custom_call.1} parent=1 // pred_region
      %s16 = ssub.s32 384, 384
      %17 = vsyncadd [#allocation3], %s16
      %s19 = sshll.u32 [#allocation2], 4
      %s20 = int_to_ptr.vmem [resolvable:$true] %s19
      %22 = dma.hbm_to_vmem [thread:$0]  %s0, 384, %s20, [#allocation3]
    $region5: #{tpu_custom_call.1} parent=1 // pred_fallthru
      _
    // Predicated region
    $region6: #{tpu_custom_call.1} parent=1 // pred_check
      _
    $region7: #{tpu_custom_call.1} parent=1 // pred_check_branch
      %24 = sbr.rel (0) target = $region9
    $region8: #{tpu_custom_call.1} parent=1 // pred_region
      _
    $region9: #{tpu_custom_call.1} parent=1 // pred_fallthru
      _
    // Predicated region
    $region10: #{tpu_custom_call.1} parent=1 // pred_check
      _
    $region11: #{tpu_custom_call.1} parent=1 // pred_check_branch
      %26 = sbr.rel (0) target = $region13
    $region12: #{tpu_custom_call.1} parent=1 // pred_region
      _
    $region13: #{tpu_custom_call.1} parent=1 // pred_fallthru
      _
    // Predicated region
    $region14: #{tpu_custom_call.1} parent=1 // pred_check
      _
    $region15: #{tpu_custom_call.1} parent=1 // pred_check_branch
      %28 = sbr.rel (0) target = $region17
    $region16: #{tpu_custom_call.1} parent=1 // pred_region
      _
    $region17: #{tpu_custom_call.1} parent=1 // pred_fallthru
      _
    // Predicated region
    $region18: #{tpu_custom_call.1} parent=1 // pred_check
      _
    $region19: #{tpu_custom_call.1} parent=1 // pred_check_branch
      %30 = sbr.rel (0) target = $region21
    $region20: #{tpu_custom_call.1} parent=1 // pred_region
      _
    $region21: #{tpu_custom_call.1} parent=1 // pred_fallthru
      _
    // Predicated region
    $region22: #{tpu_custom_call.1} parent=1 // pred_check
      _
    $region23: #{tpu_custom_call.1} parent=1 // pred_check_branch
      %32 = sbr.rel (0) target = $region25
    $region24: #{tpu_custom_call.1} parent=1 // pred_region
      _
    $region25: #{tpu_custom_call.1} parent=1 // pred_fallthru
      _
    // Predicated region
    $region26: #{tpu_custom_call.1} parent=1 // pred_check
      _
    $region27: #{tpu_custom_call.1} parent=1 // pred_check_branch
      %34 = sbr.rel (0) target = $region29
    $region28: #{tpu_custom_call.1} parent=1 // pred_region
      %35 = dma.done [#allocation3], 384
    $region29: #{tpu_custom_call.1} parent=1 // pred_fallthru
      _
    %v36 = vld [vmem:[#allocation2] sm:$0xff]
    %v37 = vld [vmem:[#allocation2 + $0x8] sm:$0xff]
    %v38 = vld [vmem:[#allocation2 + $0x10] sm:$0xff]
    %39 = vrot.lane.b32.xlu0 %v36, 127
    %v40 = vpop.permute.xlu0 %39
    %41 = vrot.lane.b32.xlu0 %v37, 127
    %v42 = vpop.permute.xlu0 %41
    %43 = vrot.lane.b32.xlu0 %v38, 127
    %v44 = vpop.permute.xlu0 %43
    %v45 = vlaneseq
    %v46 = vand.u32 %v45, 127
    %vm47 = vcmp.lt.s32.totalorder %v46, 127
    %v48 = vsel %vm47, %v42, %v44
    %v49 = vsel %vm47, %v40, %v42
    %v50 = vsel %vm47, %v44, %v40
    %51 = vrot.lane.b32.xlu0 %v36, 126
    %v52 = vpop.permute.xlu0 %51
    %53 = vrot.lane.b32.xlu0 %v37, 126
    %v54 = vpop.permute.xlu0 %53
    %55 = vrot.lane.b32.xlu0 %v38, 126
    %v56 = vpop.permute.xlu0 %55
    %vm57 = vcmp.lt.s32.totalorder %v46, 126
    %v58 = vsel %vm57, %v54, %v56
    %v59 = vsel %vm57, %v52, %v54
    %v60 = vsel %vm57, %v56, %v52
    %61 = vrot.lane.b32.xlu0 %v36, 110
    %v62 = vpop.permute.xlu0 %61
    %63 = vrot.lane.b32.xlu0 %v37, 110
    %v64 = vpop.permute.xlu0 %63
    %65 = vrot.lane.b32.xlu0 %v38, 110
    %v66 = vpop.permute.xlu0 %65
    %vm67 = vcmp.lt.s32.totalorder %v46, 110
    %v68 = vsel %vm67, %v64, %v66
    %v69 = vsel %vm67, %v62, %v64
    %v70 = vsel %vm67, %v66, %v62
    %71 = vrot.lane.b32.xlu0 %v36, 109
    %v72 = vpop.permute.xlu0 %71
    %73 = vrot.lane.b32.xlu0 %v37, 109
    %v74 = vpop.permute.xlu0 %73
    %75 = vrot.lane.b32.xlu0 %v38, 109
    %v76 = vpop.permute.xlu0 %75
    %vm77 = vcmp.lt.s32.totalorder %v46, 109
    %v78 = vsel %vm77, %v74, %v76
    %v79 = vsel %vm77, %v72, %v74
    %v80 = vsel %vm77, %v76, %v72
    %81 = vrot.lane.b32.xlu0 %v36, 108
    %v82 = vpop.permute.xlu0 %81
    %83 = vrot.lane.b32.xlu0 %v37, 108
    %v84 = vpop.permute.xlu0 %83
    %85 = vrot.lane.b32.xlu0 %v38, 108
    %v86 = vpop.permute.xlu0 %85
    %vm87 = vcmp.lt.s32.totalorder %v46, 108
    %v88 = vsel %vm87, %v84, %v86
    %v89 = vsel %vm87, %v82, %v84
    %v90 = vsel %vm87, %v86, %v82
    %91 = vrot.lane.b32.xlu0 %v36, 92
    %v92 = vpop.permute.xlu0 %91
    %93 = vrot.lane.b32.xlu0 %v37, 92
    %v94 = vpop.permute.xlu0 %93
    %95 = vrot.lane.b32.xlu0 %v38, 92
    %v96 = vpop.permute.xlu0 %95
    %vm97 = vcmp.lt.s32.totalorder %v46, 92
    %v98 = vsel %vm97, %v94, %v96
    %v99 = vsel %vm97, %v92, %v94
    %v100 = vsel %vm97, %v96, %v92
    %101 = vrot.lane.b32.xlu0 %v36, 91
    %v102 = vpop.permute.xlu0 %101
    %103 = vrot.lane.b32.xlu0 %v37, 91
    %v104 = vpop.permute.xlu0 %103
    %105 = vrot.lane.b32.xlu0 %v38, 91
    %v106 = vpop.permute.xlu0 %105
    %vm107 = vcmp.lt.s32.totalorder %v46, 91
    %v108 = vsel %vm107, %v104, %v106
    %v109 = vsel %vm107, %v102, %v104
    %v110 = vsel %vm107, %v106, %v102
    %111 = vrot.lane.b32.xlu0 %v36, 90
    %v112 = vpop.permute.xlu0 %111
    %113 = vrot.lane.b32.xlu0 %v37, 90
    %v114 = vpop.permute.xlu0 %113
    %115 = vrot.lane.b32.xlu0 %v38, 90
    %v116 = vpop.permute.xlu0 %115
    %vm117 = vcmp.lt.s32.totalorder %v46, 90
    %v118 = vsel %vm117, %v114, %v116
    %v119 = vsel %vm117, %v112, %v114
    %v120 = vsel %vm117, %v116, %v112
    %v121 = vld [vmem:[%s1] sm:$0xff]
    %v122 = vld [vmem:[%s2] sm:$0xff]
    %124 = vset.pattern.permute.xlu0 0
    %125 = vperm.xlu0 %124, %v122
    %v126 = vpop.permute.xlu0 %125
    %vm128 = vcmask 588800
    %v130 = vsel %vm128, %v121, 0
    %132 = vmatprep.subr.mxu0 0.0
    %133 = vmatpush1.msra.mxu0 0.0
    %134 = vmatprep.subr.mxu0 0.0
    %135 = vmatpush1.msra.mxu0 0.0
    %136 = vmatprep.subr.mxu0 0.0
    %137 = vmatpush1.msra.mxu0 0.0
    %138 = vmatprep.subr.mxu0 0.0
    %139 = vmatpush1.msra.mxu0 0.0
    %140 = vmatprep.subr.mxu0 0.0
    %141 = vmatpush1.msra.mxu0 0.0
    %142 = vmatprep.subr.mxu0 0.0
    %143 = vmatpush1.msra.mxu0 0.0
    %144 = vmatprep.subr.mxu0 0.0
    %145 = vmatpush1.msra.mxu0 0.0
    %146 = vmatprep.subr.mxu0 %v118
    %147 = vmatpush1.msra.mxu0 %v119
    %148 = vmatprep.subr.mxu0 %v108
    %149 = vmatpush1.msra.mxu0 %v109
    %150 = vmatprep.subr.mxu0 %v98
    %151 = vmatpush1.msra.mxu0 %v99
    %152 = vmatprep.subr.mxu0 %v88
    %153 = vmatpush1.msra.mxu0 %v89
    %154 = vmatprep.subr.mxu0 %v78
    %155 = vmatpush1.msra.mxu0 %v79
    %156 = vmatprep.subr.mxu0 %v68
    %157 = vmatpush1.msra.mxu0 %v69
    %158 = vmatprep.subr.mxu0 %v58
    %159 = vmatpush1.msra.mxu0 %v59
    %160 = vmatprep.subr.mxu0 %v48
    %161 = vmatpush1.msra.mxu0 %v49
    %162 = vmatprep.subr.mxu0 %v37
    %163 = vmatpush1.msra.mxu0 %v36
    %164 = vmatprep.subr.mxu0 0.0
    %165 = vmatpush2.msra.mxu0 0.0
    %166 = vmatprep.subr.mxu0 0.0
    %167 = vmatpush2.msra.mxu0 0.0
    %168 = vmatprep.subr.mxu0 0.0
    %169 = vmatpush2.msra.mxu0 0.0
    %170 = vmatprep.subr.mxu0 0.0
    %171 = vmatpush2.msra.mxu0 0.0
    %172 = vmatprep.subr.mxu0 0.0
    %173 = vmatpush2.msra.mxu0 0.0
    %174 = vmatprep.subr.mxu0 0.0
    %175 = vmatpush2.msra.mxu0 0.0
    %176 = vmatprep.subr.mxu0 0.0
    %177 = vmatpush2.msra.mxu0 0.0
    %178 = vmatprep.subr.mxu0 0.0
    %179 = vmatpush2.msra.mxu0 0.0
    %180 = vmatprep.subr.mxu0 0.0
    %181 = vmatpush2.msra.mxu0 0.0
    %182 = vmatprep.subr.mxu0 0.0
    %183 = vmatpush2.msra.mxu0 0.0
    %184 = vmatprep.subr.mxu0 0.0
    %185 = vmatpush2.msra.mxu0 0.0
    %186 = vmatprep.subr.mxu0 0.0
    %187 = vmatpush2.msra.mxu0 0.0
    %188 = vmatprep.subr.mxu0 0.0
    %189 = vmatpush2.msra.mxu0 0.0
    %190 = vmatprep.subr.mxu0 0.0
    %191 = vmatpush2.msra.mxu0 0.0
    %192 = vmatprep.subr.mxu0 0.0
    %193 = vmatpush2.msra.mxu0 0.0
    %194 = vmatprep.subr.mxu0 0.0
    %195 = vmatpush2.msra.mxu0 0.0
    %196 = vmatprep.mubr.f32.mxu0 0.0
    %197 = vmatmul.mubr.f32.gmra.mxu0 %v130
    %v198 = vpop.f32.mrf.mxu0
    %v199 = vadd.f32 %v126, %v198
    %v200 = vpop.f32.mrf.mxu0
    %v201 = vadd.f32 %v126, %v200
    %202 = vdwg.mxu0
    %203 = vmatprep.subr.mxu0 0.0
    %204 = vmatpush1.msra.mxu0 0.0
    %205 = vmatprep.subr.mxu0 0.0
    %206 = vmatpush1.msra.mxu0 0.0
    %207 = vmatprep.subr.mxu0 0.0
    %208 = vmatpush1.msra.mxu0 0.0
    %209 = vmatprep.subr.mxu0 0.0
    %210 = vmatpush1.msra.mxu0 0.0
    %211 = vmatprep.subr.mxu0 0.0
    %212 = vmatpush1.msra.mxu0 0.0
    %213 = vmatprep.subr.mxu0 0.0
    %214 = vmatpush1.msra.mxu0 0.0
    %215 = vmatprep.subr.mxu0 0.0
    %216 = vmatpush1.msra.mxu0 0.0
    %217 = vmatprep.subr.mxu0 0.0
    %218 = vmatpush1.msra.mxu0 %v120
    %219 = vmatprep.subr.mxu0 0.0
    %220 = vmatpush1.msra.mxu0 %v110
    %221 = vmatprep.subr.mxu0 0.0
    %222 = vmatpush1.msra.mxu0 %v100
    %223 = vmatprep.subr.mxu0 0.0
    %224 = vmatpush1.msra.mxu0 %v90
    %225 = vmatprep.subr.mxu0 0.0
    %226 = vmatpush1.msra.mxu0 %v80
    %227 = vmatprep.subr.mxu0 0.0
    %228 = vmatpush1.msra.mxu0 %v70
    %229 = vmatprep.subr.mxu0 0.0
    %230 = vmatpush1.msra.mxu0 %v60
    %231 = vmatprep.subr.mxu0 0.0
    %232 = vmatpush1.msra.mxu0 %v50
    %233 = vmatprep.subr.mxu0 0.0
    %234 = vmatpush1.msra.mxu0 %v38
    %235 = vmatprep.subr.mxu0 0.0
    %236 = vmatpush2.msra.mxu0 0.0
    %237 = vmatprep.subr.mxu0 0.0
    %238 = vmatpush2.msra.mxu0 0.0
    %239 = vmatprep.subr.mxu0 0.0
    %240 = vmatpush2.msra.mxu0 0.0
    %241 = vmatprep.subr.mxu0 0.0
    %242 = vmatpush2.msra.mxu0 0.0
    %243 = vmatprep.subr.mxu0 0.0
    %244 = vmatpush2.msra.mxu0 0.0
    %245 = vmatprep.subr.mxu0 0.0
    %246 = vmatpush2.msra.mxu0 0.0
    %247 = vmatprep.subr.mxu0 0.0
    %248 = vmatpush2.msra.mxu0 0.0
    %249 = vmatprep.subr.mxu0 0.0
    %250 = vmatpush2.msra.mxu0 0.0
    %251 = vmatprep.subr.mxu0 0.0
    %252 = vmatpush2.msra.mxu0 0.0
    %253 = vmatprep.subr.mxu0 0.0
    %254 = vmatpush2.msra.mxu0 0.0
    %255 = vmatprep.subr.mxu0 0.0
    %256 = vmatpush2.msra.mxu0 0.0
    %257 = vmatprep.subr.mxu0 0.0
    %258 = vmatpush2.msra.mxu0 0.0
    %259 = vmatprep.subr.mxu0 0.0
    %260 = vmatpush2.msra.mxu0 0.0
    %261 = vmatprep.subr.mxu0 0.0
    %262 = vmatpush2.msra.mxu0 0.0
    %263 = vmatprep.subr.mxu0 0.0
    %264 = vmatpush2.msra.mxu0 0.0
    %265 = vmatprep.subr.mxu0 0.0
    %266 = vmatpush2.msra.mxu0 0.0
    %267 = vmatprep.mubr.f32.mxu0 0.0
    %268 = vmatmul.mubr.f32.gmra.mxu0 %v130
    %v269 = vpop.f32.mrf.mxu0
    %v270 = vadd.f32 %v126, %v269
    %v271 = vpop.f32.mrf.mxu0
    %272 = vdwg.mxu0
    %v273 = vmax.f32 %v199, 0.0
    %v274 = vmax.f32 %v201, 0.0
    %v275 = vmax.f32 %v270, 0.0
    %v276 = vld [vmem:[%s5] sm:$0x7]
    %v278 = vlaneseq
    %v279 = vshrl.u32 %v278, 7
    %v280 = vsub.s32 0, %v279
    %v281 = vrot.slane %v276, %v280
    %v282 = vlaneseq
    %v283 = vshrl.u32 %v282, 7
    %v284 = vsub.s32 1, %v283
    %v285 = vrot.slane %v276, %v284
    %v286 = vlaneseq
    %v287 = vshrl.u32 %v286, 7
    %v288 = vsub.s32 2, %v287
    %v289 = vrot.slane %v276, %v288
    %v293 = vmul.f32 %v273, %v281
    %v294 = vmul.f32 %v274, %v285
    %v295 = vmul.f32 %v275, %v289
    %296 = vrot.lane.b32.xlu0 %v293, 19
    %v297 = vpop.permute.xlu0 %296
    %298 = vrot.lane.b32.xlu0 %v294, 19
    %v299 = vpop.permute.xlu0 %298
    %300 = vrot.lane.b32.xlu0 %v295, 19
    %v301 = vpop.permute.xlu0 %300
    %vm302 = vcmp.lt.s32.totalorder %v46, 19
    %v303 = vsel %vm302, %v299, %v301
    %v304 = vsel %vm302, %v297, %v299
    %v305 = vsel %vm302, %v301, %v297
    %306 = vrot.lane.b32.xlu0 %v293, 18
    %v307 = vpop.permute.xlu0 %306
    %308 = vrot.lane.b32.xlu0 %v294, 18
    %v309 = vpop.permute.xlu0 %308
    %310 = vrot.lane.b32.xlu0 %v295, 18
    %v311 = vpop.permute.xlu0 %310
    %vm312 = vcmp.lt.s32.totalorder %v46, 18
    %v313 = vsel %vm312, %v309, %v311
    %v314 = vsel %vm312, %v307, %v309
    %v315 = vsel %vm312, %v311, %v307
    %316 = vrot.lane.b32.xlu0 %v293, 17
    %v317 = vpop.permute.xlu0 %316
    %318 = vrot.lane.b32.xlu0 %v294, 17
    %v319 = vpop.permute.xlu0 %318
    %320 = vrot.lane.b32.xlu0 %v295, 17
    %v321 = vpop.permute.xlu0 %320
    %vm322 = vcmp.lt.s32.totalorder %v46, 17
    %v323 = vsel %vm322, %v319, %v321
    %v324 = vsel %vm322, %v317, %v319
    %v325 = vsel %vm322, %v321, %v317
    %326 = vrot.lane.b32.xlu0 %v293, 1
    %v327 = vpop.permute.xlu0 %326
    %328 = vrot.lane.b32.xlu0 %v294, 1
    %v329 = vpop.permute.xlu0 %328
    %330 = vrot.lane.b32.xlu0 %v295, 1
    %v331 = vpop.permute.xlu0 %330
    %vm332 = vcmp.lt.s32.totalorder %v46, 1
    %v333 = vsel %vm332, %v329, %v331
    %v334 = vsel %vm332, %v327, %v329
    %v335 = vsel %vm332, %v331, %v327
    %336 = vrot.lane.b32.xlu0 %v293, 127
    %v337 = vpop.permute.xlu0 %336
    %338 = vrot.lane.b32.xlu0 %v294, 127
    %v339 = vpop.permute.xlu0 %338
    %340 = vrot.lane.b32.xlu0 %v295, 127
    %v341 = vpop.permute.xlu0 %340
    %v342 = vsel %vm47, %v339, %v341
    %v343 = vsel %vm47, %v337, %v339
    %v344 = vsel %vm47, %v341, %v337
    %345 = vrot.lane.b32.xlu0 %v293, 111
    %v346 = vpop.permute.xlu0 %345
    %347 = vrot.lane.b32.xlu0 %v294, 111
    %v348 = vpop.permute.xlu0 %347
    %349 = vrot.lane.b32.xlu0 %v295, 111
    %v350 = vpop.permute.xlu0 %349
    %vm351 = vcmp.lt.s32.totalorder %v46, 111
    %v352 = vsel %vm351, %v348, %v350
    %v353 = vsel %vm351, %v346, %v348
    %v354 = vsel %vm351, %v350, %v346
    %355 = vrot.lane.b32.xlu0 %v293, 110
    %v356 = vpop.permute.xlu0 %355
    %357 = vrot.lane.b32.xlu0 %v294, 110
    %v358 = vpop.permute.xlu0 %357
    %359 = vrot.lane.b32.xlu0 %v295, 110
    %v360 = vpop.permute.xlu0 %359
    %v361 = vsel %vm67, %v358, %v360
    %v362 = vsel %vm67, %v356, %v358
    %v363 = vsel %vm67, %v360, %v356
    %364 = vrot.lane.b32.xlu0 %v293, 109
    %v365 = vpop.permute.xlu0 %364
    %366 = vrot.lane.b32.xlu0 %v294, 109
    %v367 = vpop.permute.xlu0 %366
    %368 = vrot.lane.b32.xlu0 %v295, 109
    %v369 = vpop.permute.xlu0 %368
    %v370 = vsel %vm77, %v367, %v369
    %v371 = vsel %vm77, %v365, %v367
    %v372 = vsel %vm77, %v369, %v365
    %v373 = vld [vmem:[%s3] sm:$0xff]
    %v374 = vld [vmem:[%s4] sm:$0xff]
    %376 = vset.pattern.permute.xlu0 0
    %377 = vperm.xlu0 %376, %v374
    %v378 = vpop.permute.xlu0 %377
    %v381 = vsel %vm128, %v373, 0
    %383 = vmatprep.subr.mxu0 0.0
    %384 = vmatpush1.msra.mxu0 0.0
    %385 = vmatprep.subr.mxu0 0.0
    %386 = vmatpush1.msra.mxu0 0.0
    %387 = vmatprep.subr.mxu0 0.0
    %388 = vmatpush1.msra.mxu0 0.0
    %389 = vmatprep.subr.mxu0 0.0
    %390 = vmatpush1.msra.mxu0 0.0
    %391 = vmatprep.subr.mxu0 0.0
    %392 = vmatpush1.msra.mxu0 0.0
    %393 = vmatprep.subr.mxu0 0.0
    %394 = vmatpush1.msra.mxu0 0.0
    %395 = vmatprep.subr.mxu0 0.0
    %396 = vmatpush1.msra.mxu0 0.0
    %397 = vmatprep.subr.mxu0 %v370
    %398 = vmatpush1.msra.mxu0 %v371
    %399 = vmatprep.subr.mxu0 %v361
    %400 = vmatpush1.msra.mxu0 %v362
    %401 = vmatprep.subr.mxu0 %v352
    %402 = vmatpush1.msra.mxu0 %v353
    %403 = vmatprep.subr.mxu0 %v342
    %404 = vmatpush1.msra.mxu0 %v343
    %405 = vmatprep.subr.mxu0 %v294
    %406 = vmatpush1.msra.mxu0 %v293
    %407 = vmatprep.subr.mxu0 %v334
    %408 = vmatpush1.msra.mxu0 %v335
    %409 = vmatprep.subr.mxu0 %v324
    %410 = vmatpush1.msra.mxu0 %v325
    %411 = vmatprep.subr.mxu0 %v314
    %412 = vmatpush1.msra.mxu0 %v315
    %413 = vmatprep.subr.mxu0 %v304
    %414 = vmatpush1.msra.mxu0 %v305
    %415 = vmatprep.subr.mxu0 0.0
    %416 = vmatpush2.msra.mxu0 0.0
    %417 = vmatprep.subr.mxu0 0.0
    %418 = vmatpush2.msra.mxu0 0.0
    %419 = vmatprep.subr.mxu0 0.0
    %420 = vmatpush2.msra.mxu0 0.0
    %421 = vmatprep.subr.mxu0 0.0
    %422 = vmatpush2.msra.mxu0 0.0
    %423 = vmatprep.subr.mxu0 0.0
    %424 = vmatpush2.msra.mxu0 0.0
    %425 = vmatprep.subr.mxu0 0.0
    %426 = vmatpush2.msra.mxu0 0.0
    %427 = vmatprep.subr.mxu0 0.0
    %428 = vmatpush2.msra.mxu0 0.0
    %429 = vmatprep.subr.mxu0 0.0
    %430 = vmatpush2.msra.mxu0 0.0
    %431 = vmatprep.subr.mxu0 0.0
    %432 = vmatpush2.msra.mxu0 0.0
    %433 = vmatprep.subr.mxu0 0.0
    %434 = vmatpush2.msra.mxu0 0.0
    %435 = vmatprep.subr.mxu0 0.0
    %436 = vmatpush2.msra.mxu0 0.0
    %437 = vmatprep.subr.mxu0 0.0
    %438 = vmatpush2.msra.mxu0 0.0
    %439 = vmatprep.subr.mxu0 0.0
    %440 = vmatpush2.msra.mxu0 0.0
    %441 = vmatprep.subr.mxu0 0.0
    %442 = vmatpush2.msra.mxu0 0.0
    %443 = vmatprep.subr.mxu0 0.0
    %444 = vmatpush2.msra.mxu0 0.0
    %445 = vmatprep.subr.mxu0 0.0
    %446 = vmatpush2.msra.mxu0 0.0
    %447 = vmatprep.mubr.f32.mxu0 0.0
    %448 = vmatmul.mubr.f32.gmra.mxu0 %v381
    %v449 = vpop.f32.mrf.mxu0
    %v450 = vadd.f32 %v378, %v449
    %v451 = vpop.f32.mrf.mxu0
    %v452 = vadd.f32 %v378, %v451
    %453 = vdwg.mxu0
    %454 = vmatprep.subr.mxu0 0.0
    %455 = vmatpush1.msra.mxu0 0.0
    %456 = vmatprep.subr.mxu0 0.0
    %457 = vmatpush1.msra.mxu0 0.0
    %458 = vmatprep.subr.mxu0 0.0
    %459 = vmatpush1.msra.mxu0 0.0
    %460 = vmatprep.subr.mxu0 0.0
    %461 = vmatpush1.msra.mxu0 0.0
    %462 = vmatprep.subr.mxu0 0.0
    %463 = vmatpush1.msra.mxu0 0.0
    %464 = vmatprep.subr.mxu0 0.0
    %465 = vmatpush1.msra.mxu0 0.0
    %466 = vmatprep.subr.mxu0 0.0
    %467 = vmatpush1.msra.mxu0 0.0
    %468 = vmatprep.subr.mxu0 0.0
    %469 = vmatpush1.msra.mxu0 %v372
    %470 = vmatprep.subr.mxu0 0.0
    %471 = vmatpush1.msra.mxu0 %v363
    %472 = vmatprep.subr.mxu0 0.0
    %473 = vmatpush1.msra.mxu0 %v354
    %474 = vmatprep.subr.mxu0 0.0
    %475 = vmatpush1.msra.mxu0 %v344
    %476 = vmatprep.subr.mxu0 0.0
    %477 = vmatpush1.msra.mxu0 %v295
    %478 = vmatprep.subr.mxu0 0.0
    %479 = vmatpush1.msra.mxu0 %v333
    %480 = vmatprep.subr.mxu0 0.0
    %481 = vmatpush1.msra.mxu0 %v323
    %482 = vmatprep.subr.mxu0 0.0
    %483 = vmatpush1.msra.mxu0 %v313
    %484 = vmatprep.subr.mxu0 0.0
    %485 = vmatpush1.msra.mxu0 %v303
    %486 = vmatprep.subr.mxu0 0.0
    %487 = vmatpush2.msra.mxu0 0.0
    %488 = vmatprep.subr.mxu0 0.0
    %489 = vmatpush2.msra.mxu0 0.0
    %490 = vmatprep.subr.mxu0 0.0
    %491 = vmatpush2.msra.mxu0 0.0
    %492 = vmatprep.subr.mxu0 0.0
    %493 = vmatpush2.msra.mxu0 0.0
    %494 = vmatprep.subr.mxu0 0.0
    %495 = vmatpush2.msra.mxu0 0.0
    %496 = vmatprep.subr.mxu0 0.0
    %497 = vmatpush2.msra.mxu0 0.0
    %498 = vmatprep.subr.mxu0 0.0
    %499 = vmatpush2.msra.mxu0 0.0
    %500 = vmatprep.subr.mxu0 0.0
    %501 = vmatpush2.msra.mxu0 0.0
    %502 = vmatprep.subr.mxu0 0.0
    %503 = vmatpush2.msra.mxu0 0.0
    %504 = vmatprep.subr.mxu0 0.0
    %505 = vmatpush2.msra.mxu0 0.0
    %506 = vmatprep.subr.mxu0 0.0
    %507 = vmatpush2.msra.mxu0 0.0
    %508 = vmatprep.subr.mxu0 0.0
    %509 = vmatpush2.msra.mxu0 0.0
    %510 = vmatprep.subr.mxu0 0.0
    %511 = vmatpush2.msra.mxu0 0.0
    %512 = vmatprep.subr.mxu0 0.0
    %513 = vmatpush2.msra.mxu0 0.0
    %514 = vmatprep.subr.mxu0 0.0
    %515 = vmatpush2.msra.mxu0 0.0
    %516 = vmatprep.subr.mxu0 0.0
    %517 = vmatpush2.msra.mxu0 0.0
    %518 = vmatprep.mubr.f32.mxu0 0.0
    %519 = vmatmul.mubr.f32.gmra.mxu0 %v381
    %v520 = vpop.f32.mrf.mxu0
    %v521 = vadd.f32 %v378, %v520
    %v522 = vpop.f32.mrf.mxu0
    %523 = vdwg.mxu0
    %v524 = vadd.f32 %v450, %v79
    %v525 = vadd.f32 %v452, %v78
    %v526 = vadd.f32 %v521, %v80
    %v527 = vmax.f32 %v524, 0.0
    %v528 = vmax.f32 %v525, 0.0
    %v529 = vmax.f32 %v526, 0.0
    %530 = vst [vmem:[#allocation5] sm:$0xff] %v527
    %531 = vst [vmem:[#allocation5 + $0x8] sm:$0xff] %v528
    %532 = vst [vmem:[#allocation5 + $0x10] sm:$0xff] %v529
    // Predicated region
    $region30: #{tpu_custom_call.1} parent=1 // pred_check
      _
    $region31: #{tpu_custom_call.1} parent=1 // pred_check_branch
      %534 = sbr.rel (0) target = $region33
    $region32: #{tpu_custom_call.1} parent=1 // pred_region
      %s536 = ssub.s32 384, 384
      %537 = vsyncadd [#allocation4], %s536
      %s539 = sshll.u32 [#allocation5], 4
      %s540 = int_to_ptr.vmem [resolvable:$true] %s539
      %542 = dma.vmem_to_hbm [thread:$0]  %s540, 384, %s6, [#allocation4]
    $region33: #{tpu_custom_call.1} parent=1 // pred_fallthru
      _
    // Predicated region
    $region34: #{tpu_custom_call.1} parent=1 // pred_check
      _
    $region35: #{tpu_custom_call.1} parent=1 // pred_check_branch
      %544 = sbr.rel (0) target = $region37
    $region36: #{tpu_custom_call.1} parent=1 // pred_region
      %545 = dma.done [#allocation4], 384
    $region37: #{tpu_custom_call.1} parent=1 // pred_fallthru
      _
    %546 = vsyncpa [#allocation3], 1
    %547 = vsyncpa [#allocation4], 1

</llo_original>
